<compile_context>
chip_gen: v5e
topology: v5e:2x2
jax: 0.10.0
libtpu: 0.0.40
codegen_flags: <defaults>
</compile_context>

<pallas_src>
import jax
import jax.numpy as jnp
from jax.experimental import pallas as pl
from jax.experimental.pallas import tpu as pltpu


def _round_up(x, m):
    return ((x + m - 1) // m) * m


def _gaeconv_kernel(a_ref, y_ref, r_ref, d_ref, o_ref, acc_ref):
    """Grid = (row tiles, K reduction tiles); K is the last ("arbitrary") axis.

    a_ref  : (tm, tk)  int8  unnormalized adjacency (edge-count) tile
    y_ref  : (tk, Op)  bf16  pre-projected neighbor features  X @ W_l_cat
    r_ref  : (tm, Op)  f32   pre-projected root term  X @ W_r_cat + bias
    d_ref  : (tm, 1)   f32   1 / max(deg, 1)   (mean normalization, f32)
    o_ref  : (tm, Op)  f32   leaky_relu of per-conv features, concatenated
    acc_ref: (tm, Op)  f32   lane-dense VMEM accumulator for A @ Y
    """
    k = pl.program_id(1)

    @pl.when(k == 0)
    def _init():
        acc_ref[...] = jnp.zeros_like(acc_ref)

    # Dominant work: (tm, tk) @ (tk, Op) on the MXU, bf16 operands, f32 acc.
    # int8 -> bf16 upcast is exact for counts <= 127 (clamped in the wrapper).
    a = a_ref[...].astype(jnp.bfloat16)
    acc_ref[...] += jnp.dot(a, y_ref[...], preferred_element_type=jnp.float32)

    @pl.when(k == pl.num_programs(1) - 1)
    def _finalize():
        # f32 mean normalization + root term + leaky_relu, once per row tile.
        z = acc_ref[...] * d_ref[...] + r_ref[...]
        o_ref[...] = jnp.where(z > 0, z, 0.01 * z).astype(o_ref.dtype)


def gaeconv_forward(x, edge_index, w_l, w_r, bias, *, tm=512, tk=2048):
    """x: [N, C] f32, edge_index: [2, E] int32,
    w_l, w_r: [size, C, out], bias: [size, out]  ->  features [N, out]
    (sum over the `size` convs of leaky_relu(conv_k(x, edge_index)),
    matching the module's `feature_list`)."""
    N, C = x.shape
    size, _, out_ch = w_l.shape
    out_feat = size * out_ch
    hi = jax.lax.Precision.HIGHEST

    # ---- padded / tiled geometry -------------------------------------------
    tm = _round_up(max(tm, 32), 32)              # int8 sublane packing (32 rows)
    # keep >= 2 row tiles when the graph allows it (v7x megacore: 2 TCs/chip)
    tm = min(tm, max(32, _round_up((N + 1) // 2, 32)))
    tk = _round_up(max(tk, 128), 128)            # lane-aligned reduction tile
    tk = min(tk, _round_up(N, 128))              # don't pad K past what's needed
    o_pad = max(128, _round_up(out_feat, 128))   # lane-dense output (unmasked vst)
    rows_pad = _round_up(N, tm)                  # independent padding (no lcm blowup)
    cols_pad = _round_up(N, tk)
    grid = (rows_pad // tm, cols_pad // tk)

    # ---- glue: compact adjacency + O(E) degrees -----------------------------
    # Single scatter of edge counts in int32 (keeps duplicate-edge multiplicity
    # like the reference), clamped before the int8 cast; deg via O(E) segment
    # sum over edge_index instead of an N^2 row reduction.
    # TODO(synk): for genuinely large sparse graphs replace this dense O(N^2)
    # adjacency with a CSR scalar-prefetch gather kernel.
    src, dst = edge_index[0], edge_index[1]
    adj_cnt = jnp.zeros((rows_pad, cols_pad), jnp.int32).at[dst, src].add(1)
    adj_i8 = jnp.minimum(adj_cnt, 127).astype(jnp.int8)
    deg = jnp.zeros((rows_pad,), jnp.float32).at[dst].add(1.0)
    inv_deg = (1.0 / jnp.maximum(deg, 1.0)).reshape(rows_pad, 1)

    # ---- glue: fuse the `size` convs and pre-project both linear maps -------
    wl_cat = jnp.transpose(w_l, (1, 0, 2)).reshape(C, out_feat)
    wr_cat = jnp.transpose(w_r, (1, 0, 2)).reshape(C, out_feat)
    y = jnp.zeros((cols_pad, o_pad), jnp.float32).at[:N, :out_feat].set(
        jnp.dot(x, wl_cat, precision=hi))
    y_bf16 = y.astype(jnp.bfloat16)              # streamed per K tile, lane-dense
    root = jnp.zeros((rows_pad, o_pad), jnp.float32).at[:N, :out_feat].set(
        jnp.dot(x, wr_cat, precision=hi) + bias.reshape(1, out_feat))

    # ---- VMEM budget / scheduler hints --------------------------------------
    vmem_needed = (2 * tm * tk * 1               # A tile, int8, double-buffered
                   + 2 * tk * o_pad * 2          # Y tile, bf16
                   + 2 * tm * o_pad * 4          # root tile, f32
                   + 2 * tm * 128 * 4            # inv_deg tile (lane-padded)
                   + 2 * tm * o_pad * 4          # output tile
                   + tm * o_pad * 4)             # accumulator scratch
    # floor at 32 MiB (v5e default scoped VMEM is only 16 MiB); cap at 56 MiB
    # to leave compiler-scratch headroom under v7x's 64 MiB physical VMEM.
    vmem_limit = int(min(56 * 1024 * 1024, max(32 * 1024 * 1024, 2 * vmem_needed)))

    flops = 2 * rows_pad * cols_pad * o_pad
    bytes_accessed = (rows_pad * cols_pad * 1            # A (int8)
                      + grid[0] * cols_pad * o_pad * 2   # Y re-read per row tile
                      + rows_pad * o_pad * 4             # root term
                      + rows_pad * 4                     # 1/deg
                      + rows_pad * o_pad * 4)            # output

    out_padded = pl.pallas_call(
        _gaeconv_kernel,
        out_shape=jax.ShapeDtypeStruct((rows_pad, o_pad), jnp.float32),
        grid_spec=pltpu.PrefetchScalarGridSpec(
            num_scalar_prefetch=0,
            grid=grid,
            in_specs=[
                pl.BlockSpec((tm, tk), lambda i, k: (i, k)),      # A tile
                pl.BlockSpec((tk, o_pad), lambda i, k: (k, 0)),   # Y (K tile)
                pl.BlockSpec((tm, o_pad), lambda i, k: (i, 0)),   # root (row tile)
                pl.BlockSpec((tm, 1), lambda i, k: (i, 0)),       # 1/deg (row tile)
            ],
            out_specs=pl.BlockSpec((tm, o_pad), lambda i, k: (i, 0)),
            scratch_shapes=[pltpu.VMEM((tm, o_pad), jnp.float32)],
        ),
        compiler_params=pltpu.CompilerParams(
            dimension_semantics=("parallel", "arbitrary"),
            vmem_limit_bytes=vmem_limit,
        ),
        cost_estimate=pl.CostEstimate(
            flops=int(flops), transcendentals=0,
            bytes_accessed=int(bytes_accessed)),
    )(adj_i8, y_bf16, root, inv_deg)

    # per-conv leaky_relu features come out lane-dense and concatenated; the
    # module sums them (feature_list += leaky_relu(feature)) -> cheap O(N*out).
    concat = out_padded[:N, :out_feat]
    return concat.reshape(N, size, out_ch).sum(axis=1)


def gaeconv_reference(x, edge_index, w_l, w_r, bias):
    """Pure-JAX f32 (HIGHEST precision) reference for the feature path."""
    N, C = x.shape
    size, _, out_ch = w_l.shape
    hi = jax.lax.Precision.HIGHEST
    src, dst = edge_index[0], edge_index[1]
    adj = jnp.zeros((N, N), jnp.float32).at[dst, src].add(1.0)
    deg = jnp.sum(adj, axis=1, keepdims=True)
    a_norm = adj / jnp.maximum(deg, 1.0)
    agg = jnp.dot(a_norm, x, precision=hi)
    feat_sum = None
    for k in range(size):
        z = (jnp.dot(agg, w_l[k], precision=hi)
             + jnp.dot(x, w_r[k], precision=hi)
             + bias[k][None, :])
        fk = jnp.where(z > 0, z, 0.01 * z)
        feat_sum = fk if feat_sum is None else feat_sum + fk
    return feat_sum


if __name__ == "__main__":
    key = jax.random.PRNGKey(0)
    N, E = 300, 1200          # nodes, edges (small but enough for a 3x3 tile grid)
    in_channel = 4
    out_channel = 8
    size = 3                  # number of conv layers in the GAEConv stack

    k_x, k_e, k_wl, k_wr, k_b = jax.random.split(key, 5)
    x = jax.random.normal(k_x, (N, in_channel), dtype=jnp.float32)
    edge_index = jax.random.randint(k_e, (2, E), 0, N, dtype=jnp.int32)

    # deterministic parameter init (neighbor weights+bias, root weights)
    scale = 1.0 / jnp.sqrt(jnp.float32(in_channel))
    w_l = jax.random.uniform(k_wl, (size, in_channel, out_channel),
                             minval=-scale, maxval=scale, dtype=jnp.float32)
    w_r = jax.random.uniform(k_wr, (size, in_channel, out_channel),
                             minval=-scale, maxval=scale, dtype=jnp.float32)
    bias = jax.random.uniform(k_b, (size, out_channel),
                              minval=-scale, maxval=scale, dtype=jnp.float32)

    # small tiles so the (row, K) grid and the accumulator init/finalize path
    # are genuinely exercised (rows pad to 384 -> grid (3, 3))
    feats = gaeconv_forward(x, edge_index, w_l, w_r, bias, tm=128, tk=128)
    jax.block_until_ready(feats)

    ref = gaeconv_reference(x, edge_index, w_l, w_r, bias)
    assert feats.shape == (N, out_channel)
    # Only the streamed X @ W_l operand is bf16; the adjacency counts and the
    # int8->bf16 upcast are exact and 1/deg is applied in f32, so errors are
    # small; keep the 2e-2 tolerance for margin.
    max_err = float(jnp.max(jnp.abs(feats - ref)))
    assert jnp.allclose(feats, ref, rtol=2e-2, atol=2e-2), f"max abs err {max_err}"

    print("KERNEL_OK")
</pallas_src>

<mosaic_0001>
module attributes {stable_mosaic.version = 11 : i64} {
  func.func @_gaeconv_kernel(%arg0: i32, %arg1: i32, %arg2: memref<128x128xi8, #tpu.memory_space<vmem>>, %arg3: memref<128x128xbf16, #tpu.memory_space<vmem>>, %arg4: memref<128x128xf32, #tpu.memory_space<vmem>>, %arg5: memref<128x1xf32, #tpu.memory_space<vmem>>, %arg6: memref<128x128xf32, #tpu.memory_space<vmem>>, %arg7: memref<128x128xf32, #tpu.memory_space<vmem>>) attributes {dimension_semantics = [#tpu.dimension_semantics<parallel>, #tpu.dimension_semantics<arbitrary>], iteration_bounds = array<i64: 3, 3>, scalar_prefetch = 0 : i64, scratch_operands = 1 : i64, tpu.core_type = #tpu.core_type<tc>, window_params = [{transform_indices = @transform_0, window_bounds = array<i64: 128, 128>}, {transform_indices = @transform_1, window_bounds = array<i64: 128, 128>}, {transform_indices = @transform_2, window_bounds = array<i64: 128, 128>}, {transform_indices = @transform_3, window_bounds = array<i64: 128, 1>}, {transform_indices = @transform_4, window_bounds = array<i64: 128, 128>}]} {
    %c0_i32 = arith.constant 0 : i32
    %0 = arith.cmpi eq, %arg1, %c0_i32 : i32
    %1 = arith.extui %0 : i1 to i32
    %c0_i32_0 = arith.constant 0 : i32
    %2 = arith.cmpi ne, %1, %c0_i32_0 : i32
    scf.if %2 {
      %cst_9 = arith.constant 0.000000e+00 : f32
      %13 = vector.broadcast %cst_9 : f32 to vector<128x128xf32>
      %c0_10 = arith.constant 0 : index
      %c0_11 = arith.constant 0 : index
      %14 = vector.load %arg7[%c0_10, %c0_11] : memref<128x128xf32, #tpu.memory_space<vmem>>, vector<128x128xf32>
      tpu.vector_store %arg7[%c0_10, %c0_11], %13 {strides = array<i32>} : memref<128x128xf32, #tpu.memory_space<vmem>>, vector<128x128xf32>,
    } else {
    }
    %c0 = arith.constant 0 : index
    %c0_1 = arith.constant 0 : index
    %3 = vector.load %arg2[%c0, %c0_1] : memref<128x128xi8, #tpu.memory_space<vmem>>, vector<128x128xi8>
    %4 = arith.sitofp %3 : vector<128x128xi8> to vector<128x128xbf16>
    %c0_2 = arith.constant 0 : index
    %c0_3 = arith.constant 0 : index
    %5 = vector.load %arg7[%c0_2, %c0_3] : memref<128x128xf32, #tpu.memory_space<vmem>>, vector<128x128xf32>
    %c0_4 = arith.constant 0 : index
    %c0_5 = arith.constant 0 : index
    %6 = vector.load %arg3[%c0_4, %c0_5] : memref<128x128xbf16, #tpu.memory_space<vmem>>, vector<128x128xbf16>
    %cst = arith.constant dense<0.000000e+00> : vector<128x128xf32>
    %7 = tpu.matmul %4, %6, %cst {dimension_numbers = #tpu.dot_dimension_numbers<[1], [0], [0], [1], [0, 0, 1, 1], [], []>} : vector<128x128xbf16>, vector<128x128xbf16>, vector<128x128xf32> -> vector<128x128xf32>
    %8 = arith.addf %5, %7 : vector<128x128xf32>
    %c0_6 = arith.constant 0 : index
    %c0_7 = arith.constant 0 : index
    %9 = vector.load %arg7[%c0_6, %c0_7] : memref<128x128xf32, #tpu.memory_space<vmem>>, vector<128x128xf32>
    tpu.vector_store %arg7[%c0_6, %c0_7], %8 {strides = array<i32>} : memref<128x128xf32, #tpu.memory_space<vmem>>, vector<128x128xf32>,
    %c2_i32 = arith.constant 2 : i32
    %10 = arith.cmpi eq, %arg1, %c2_i32 : i32
    %11 = arith.extui %10 : i1 to i32
    %c0_i32_8 = arith.constant 0 : i32
    %12 = arith.cmpi ne, %11, %c0_i32_8 : i32
    scf.if %12 {
      %c0_9 = arith.constant 0 : index
      %c0_10 = arith.constant 0 : index
      %13 = vector.load %arg7[%c0_9, %c0_10] : memref<128x128xf32, #tpu.memory_space<vmem>>, vector<128x128xf32>
      %c0_11 = arith.constant 0 : index
      %c0_12 = arith.constant 0 : index
      %14 = vector.load %arg5[%c0_11, %c0_12] : memref<128x1xf32, #tpu.memory_space<vmem>>, vector<128x1xf32>
      %15 = vector.broadcast %14 : vector<128x1xf32> to vector<128x128xf32>
      %16 = arith.mulf %13, %15 : vector<128x128xf32>
      %c0_13 = arith.constant 0 : index
      %c0_14 = arith.constant 0 : index
      %17 = vector.load %arg4[%c0_13, %c0_14] : memref<128x128xf32, #tpu.memory_space<vmem>>, vector<128x128xf32>
      %18 = arith.addf %16, %17 : vector<128x128xf32>
      %cst_15 = arith.constant 0.000000e+00 : f32
      %19 = vector.broadcast %cst_15 : f32 to vector<128x128xf32>
      %20 = arith.cmpf ogt, %18, %19 : vector<128x128xf32>
      %cst_16 = arith.constant 0.00999999977 : f32
      %21 = vector.broadcast %cst_16 : f32 to vector<128x128xf32>
      %22 = arith.mulf %21, %18 : vector<128x128xf32>
      %23 = arith.select %20, %18, %22 : vector<128x128xi1>, vector<128x128xf32>
      %c0_17 = arith.constant 0 : index
      %c0_18 = arith.constant 0 : index
      %24 = vector.load %arg6[%c0_17, %c0_18] : memref<128x128xf32, #tpu.memory_space<vmem>>, vector<128x128xf32>
      tpu.vector_store %arg6[%c0_17, %c0_18], %23 {strides = array<i32>} : memref<128x128xf32, #tpu.memory_space<vmem>>, vector<128x128xf32>,
    } else {
    }
    return
  }
  func.func @transform_0(%arg0: i32, %arg1: i32) -> (i32, i32) {
    %c0_i32 = arith.constant 0 : i32
    return %arg0, %arg1 : i32, i32
  }
  func.func @transform_1(%arg0: i32, %arg1: i32) -> (i32, i32) {
    %c0_i32 = arith.constant 0 : i32
    %c0_i32_0 = arith.constant 0 : i32
    return %arg1, %c0_i32 : i32, i32
  }
  func.func @transform_2(%arg0: i32, %arg1: i32) -> (i32, i32) {
    %c0_i32 = arith.constant 0 : i32
    %c0_i32_0 = arith.constant 0 : i32
    return %arg0, %c0_i32 : i32, i32
  }
  func.func @transform_3(%arg0: i32, %arg1: i32) -> (i32, i32) {
    %c0_i32 = arith.constant 0 : i32
    %c0_i32_0 = arith.constant 0 : i32
    return %arg0, %c0_i32 : i32, i32
  }
  func.func @transform_4(%arg0: i32, %arg1: i32) -> (i32, i32) {
    %c0_i32 = arith.constant 0 : i32
    %c0_i32_0 = arith.constant 0 : i32
    return %arg0, %c0_i32 : i32, i32
  }
}

</mosaic_0001>

<llo_original>
// kernel: tpu_custom_call.1
$region0: #{tpu_custom_call.1}
  #allocation0 [shape = 'u32[]', space=smem, size = 0x4, offset = 0x4, fixed_abs, tag = 'smem constant byte address 0x4 - core index']
  #allocation1 [shape = 'u32[72,128]{1,0:T(1,128)}', space=vmem, size = 0x9000, scoped, tag = 'internal scratch']
  #allocation2 [shape = 'f32[128,128]{1,0:T(8,128)}', space=vmem, size = 0x10000, scoped, tag = 'scratch operand']
  %s0 = inlined_call_operand.hbm [shape: s8[384,384], index: 0, kind: input, shape index: {}]
  %s1 = inlined_call_operand.hbm [shape: bf16[384,128], index: 1, kind: input, shape index: {}]
  %s2 = inlined_call_operand.vmem [shape: f32[384,128], index: 2, kind: input, shape index: {}]
  %s3 = inlined_call_operand.vmem [shape: f32[384,1], index: 3, kind: input, shape index: {}]
  %s4 = inlined_call_operand.hbm [shape: f32[384,128], index: 4, kind: output, shape index: {}]
  %s5 = sld [smem:[#allocation0]]
  $region65: #{tpu_custom_call.1} parent=0
    _
  %s7 = ssub.s32 1, %s5
  %s8 = scalar_select 0, %s7, %s5
  $region1: #{tpu_custom_call.1} parent=0
    #allocation3 [shape = 'u8[32768]{0}', space=vmem, size = 0x8000, scoped, tag = 'input window, operand 0']
    #allocation4 [shape = 's32[2]{0}', space=sflag, size = 0x8, scoped, tag = 'scoped memory for tpu_custom_call.1']
    #allocation5 [shape = 's32[2]{0}', space=sflag, size = 0x8, scoped, tag = 'scoped memory for tpu_custom_call.1']
    #allocation6 [shape = 'u8[65536]{0}', space=vmem, size = 0x10000, scoped, tag = 'input window, operand 1']
    #allocation7 [shape = 's32[2]{0}', space=sflag, size = 0x8, scoped, tag = 'scoped memory for tpu_custom_call.1']
    #allocation8 [shape = 'u8[131072]{0}', space=vmem, size = 0x20000, scoped, tag = 'output window, operand 0']
    %9 = vsyncpa [#allocation4], 0
    %s10 = scalar_lea.sflag [#allocation4], 1
    %11 = vsyncpa %s10, 0
    %12 = vsyncpa [#allocation7], 0
    %s13 = scalar_lea.sflag [#allocation7], 1
    %14 = vsyncpa %s13, 0
    %15 = vsyncpa [#allocation5], 0
    %s16 = scalar_lea.sflag [#allocation5], 1
    %17 = vsyncpa %s16, 0
    loop: start=0, step=1, limit=11
    $region2: #{tpu_custom_call.1} parent=1 // loop_pre_header
      _
    $region3: #{tpu_custom_call.1} parent=1 // loop_header
      %s19 = sphi 0, %s23
      %p20 = scmp.ge.s32.totalorder %s19, 11
      %s26 = sphi 0, %s38
      %s27 = sphi 0, %s34
      %s28 = sphi 0, %s26
      %s29 = sphi 0, %s27
      %s30 = sphi 0, %s28
      %s31 = sphi 0, %s29
      %s43 = sphi 0, %s45
      %s46 = sphi 0, %s43
      %s47 = sphi 0, %s46
      %s63 = sphi 0, %s47
      %s69 = sphi 0, %s71
      %s72 = sphi 0, %s69
      %s73 = sphi 0, %s72
      %s89 = sphi 0, %s73
      %s95 = sphi 0, %s97
      %s98 = sphi 0, %s95
      %s99 = sphi 0, %s98
      %s115 = sphi 0, %s99
      %s121 = sphi 0, %s123
      %s124 = sphi 0, %s121
      %s125 = sphi 0, %s124
      %s141 = sphi 0, %s125
      %s147 = sphi 0, %s149
      %s150 = sphi 0, %s147
      %s151 = sphi 0, %s150
      %s167 = sphi 0, %s151
    $region4: #{tpu_custom_call.1} parent=1 // loop_header_branch
      %22 = sbr.rel (%p20) target = $region8
    $region5: #{tpu_custom_call.1} parent=1 // loop_body
      %s24 = ssub.s32 %s19, 1
      %s25 = ssub.s32 %s19, 2
      %s32 = sadd.s32 1, %s27
      %p33 = scmp.ge.s32.totalorder %s32, 3
      %s34 = scalar_select %p33, 0, %s32
      %s35 = sadd.s32 1, %s26
      %s36 = scalar_select %p33, %s35, %s26
      %p37 = scmp.ge.s32.totalorder %s36, 3
      %s38 = scalar_select %p37, 0, %s36
      %s39 = ssub.s32 %s26, %s38
      %s40 = ssub.s32 %s27, %s34
      %s41 = sor.u32 %s39, %s40
      %p42 = scmp.eq.s32.totalorder %s41, 0
      %s44 = sadd.s32 %s43, 1
      %s45 = scalar_select %p42, %s43, %s44
      %p48 = pneg %p42
      %p49 = scmp.eq.s32.totalorder %s19, 8
      %p50 = por %p48, %p49
      %p51 = scmp.ne.s32.totalorder %s43, %s46
      %p52 = scmp.eq.s32.totalorder %s19, 0
      %p53 = por %p51, %p52
      %p54 = scmp.ne.s32.totalorder %s43, %s46
      %p55 = scmp.eq.s32.totalorder %s24, 8
      %p56 = por %p54, %p55
      %p57 = scmp.ne.s32.totalorder %s46, %s47
      %p58 = scmp.eq.s32.totalorder %s24, 0
      %p59 = por %p57, %p58
      %p60 = scmp.ne.s32.totalorder %s46, %s47
      %p61 = scmp.eq.s32.totalorder %s25, 8
      %p62 = por %p60, %p61
      %p64 = scmp.ne.s32.totalorder %s47, %s63
      %p65 = scmp.eq.s32.totalorder %s25, 0
      %p66 = por %p64, %p65
      %s67 = ssub.s32 %s27, %s34
      %p68 = scmp.eq.s32.totalorder %s67, 0
      %s70 = sadd.s32 %s69, 1
      %s71 = scalar_select %p68, %s69, %s70
      %p74 = pneg %p68
      %p75 = scmp.eq.s32.totalorder %s19, 8
      %p76 = por %p74, %p75
      %p77 = scmp.ne.s32.totalorder %s69, %s72
      %p78 = scmp.eq.s32.totalorder %s19, 0
      %p79 = por %p77, %p78
      %p80 = scmp.ne.s32.totalorder %s69, %s72
      %p81 = scmp.eq.s32.totalorder %s24, 8
      %p82 = por %p80, %p81
      %p83 = scmp.ne.s32.totalorder %s72, %s73
      %p84 = scmp.eq.s32.totalorder %s24, 0
      %p85 = por %p83, %p84
      %p86 = scmp.ne.s32.totalorder %s72, %s73
      %p87 = scmp.eq.s32.totalorder %s25, 8
      %p88 = por %p86, %p87
      %p90 = scmp.ne.s32.totalorder %s73, %s89
      %p91 = scmp.eq.s32.totalorder %s25, 0
      %p92 = por %p90, %p91
      %s93 = ssub.s32 %s26, %s38
      %p94 = scmp.eq.s32.totalorder %s93, 0
      %s96 = sadd.s32 %s95, 1
      %s97 = scalar_select %p94, %s95, %s96
      %p100 = pneg %p94
      %p101 = scmp.eq.s32.totalorder %s19, 8
      %p102 = por %p100, %p101
      %p103 = scmp.ne.s32.totalorder %s95, %s98
      %p104 = scmp.eq.s32.totalorder %s19, 0
      %p105 = por %p103, %p104
      %p106 = scmp.ne.s32.totalorder %s95, %s98
      %p107 = scmp.eq.s32.totalorder %s24, 8
      %p108 = por %p106, %p107
      %p109 = scmp.ne.s32.totalorder %s98, %s99
      %p110 = scmp.eq.s32.totalorder %s24, 0
      %p111 = por %p109, %p110
      %p112 = scmp.ne.s32.totalorder %s98, %s99
      %p113 = scmp.eq.s32.totalorder %s25, 8
      %p114 = por %p112, %p113
      %p116 = scmp.ne.s32.totalorder %s99, %s115
      %p117 = scmp.eq.s32.totalorder %s25, 0
      %p118 = por %p116, %p117
      %s119 = ssub.s32 %s26, %s38
      %p120 = scmp.eq.s32.totalorder %s119, 0
      %s122 = sadd.s32 %s121, 1
      %s123 = scalar_select %p120, %s121, %s122
      %p126 = pneg %p120
      %p127 = scmp.eq.s32.totalorder %s19, 8
      %p128 = por %p126, %p127
      %p129 = scmp.ne.s32.totalorder %s121, %s124
      %p130 = scmp.eq.s32.totalorder %s19, 0
      %p131 = por %p129, %p130
      %p132 = scmp.ne.s32.totalorder %s121, %s124
      %p133 = scmp.eq.s32.totalorder %s24, 8
      %p134 = por %p132, %p133
      %p135 = scmp.ne.s32.totalorder %s124, %s125
      %p136 = scmp.eq.s32.totalorder %s24, 0
      %p137 = por %p135, %p136
      %p138 = scmp.ne.s32.totalorder %s124, %s125
      %p139 = scmp.eq.s32.totalorder %s25, 8
      %p140 = por %p138, %p139
      %p142 = scmp.ne.s32.totalorder %s125, %s141
      %p143 = scmp.eq.s32.totalorder %s25, 0
      %p144 = por %p142, %p143
      %s145 = ssub.s32 %s26, %s38
      %p146 = scmp.eq.s32.totalorder %s145, 0
      %s148 = sadd.s32 %s147, 1
      %s149 = scalar_select %p146, %s147, %s148
      %p152 = pneg %p146
      %p153 = scmp.eq.s32.totalorder %s19, 8
      %p154 = por %p152, %p153
      %p155 = scmp.ne.s32.totalorder %s147, %s150
      %p156 = scmp.eq.s32.totalorder %s19, 0
      %p157 = por %p155, %p156
      %p158 = scmp.ne.s32.totalorder %s147, %s150
      %p159 = scmp.eq.s32.totalorder %s24, 8
      %p160 = por %p158, %p159
      %p161 = scmp.ne.s32.totalorder %s150, %s151
      %p162 = scmp.eq.s32.totalorder %s24, 0
      %p163 = por %p161, %p162
      %p164 = scmp.ne.s32.totalorder %s150, %s151
      %p165 = scmp.eq.s32.totalorder %s25, 8
      %p166 = por %p164, %p165
      %p168 = scmp.ne.s32.totalorder %s151, %s167
      %p169 = scmp.eq.s32.totalorder %s25, 0
      %p170 = por %p168, %p169
      %p171 = scmp.le.s32.totalorder 1, %s19
      %p172 = scmp.lt.s32.totalorder %s19, 10
      %p173 = pnand %p171, %p172
      %p174 = pneg %p173
      // Predicated region
      $region9: #{tpu_custom_call.1} parent=5 // pred_check
        _
      $region10: #{tpu_custom_call.1} parent=5 // pred_check_branch
        %176 = sbr.rel (%p173) target = $region12
      $region11: #{tpu_custom_call.1} parent=5 // pred_region
        %s177 = ssub.s32 %s19, 1
      $region12: #{tpu_custom_call.1} parent=5 // pred_fallthru
        _
      %p178 = scmp.lt.s32.totalorder %s19, 9
      // Predicated region
      $region13: #{tpu_custom_call.1} parent=5 // pred_check
        %p179 = pneg %p178
      $region14: #{tpu_custom_call.1} parent=5 // pred_check_branch
        %181 = sbr.rel (%p179) target = $region16
      $region15: #{tpu_custom_call.1} parent=5 // pred_region
        // Predicated region
        $region17: #{tpu_custom_call.1} parent=15 // pred_check
          %p182 = pneg %p53
        $region18: #{tpu_custom_call.1} parent=15 // pred_check_branch
          %184 = sbr.rel (%p182) target = $region20
        $region19: #{tpu_custom_call.1} parent=15 // pred_region
          %s185 = sand.u32 %s43, 1
          %s186 = scalar_lea.sflag [#allocation4], %s185
          %s187 = sand.u32 %s43, 1
          %s188 = smul.addr %s187, 32
          %s189 = scalar_lea.vmem [#allocation3], %s188
          %s190 = smul.u32 4, %s26
          %192 = vsyncadd %s186, 0
          %s193 = smul.addr %s190, 3
          %s194 = sadd.s32 %s27, %s193
          %s195 = smul.addr %s194, 8
          %s196 = scalar_lea.hbm %s0, %s195
          %s197 = sshll.u32 %s196, 4
          %s198 = int_to_ptr.hbm [resolvable:$true] %s197
          %s199 = sshll.u32 %s189, 4
          %s200 = int_to_ptr.vmem [resolvable:$true] %s199
          %205 = dma.hbm_to_vmem [thread:$0]  %s198, 512, %s200, %s186, 384, 128, 8
        $region20: #{tpu_custom_call.1} parent=15 // pred_fallthru
          _
        // Predicated region
        $region21: #{tpu_custom_call.1} parent=15 // pred_check
          %p206 = pneg %p79
        $region22: #{tpu_custom_call.1} parent=15 // pred_check_branch
          %208 = sbr.rel (%p206) target = $region24
        $region23: #{tpu_custom_call.1} parent=15 // pred_region
          %s209 = sand.u32 %s69, 1
          %s210 = scalar_lea.sflag [#allocation7], %s209
          %s211 = sand.u32 %s69, 1
          %s212 = smul.addr %s211, 64
          %s213 = scalar_lea.vmem [#allocation6], %s212
          %s214 = smul.u32 16, %s27
          %216 = vsyncadd %s210, 0
          %s217 = smul.addr %s214, 4
          %s218 = scalar_lea.hbm %s1, %s217
          %s219 = sshll.u32 %s218, 4
          %s220 = int_to_ptr.hbm [resolvable:$true] %s219
          %s221 = sshll.u32 %s213, 4
          %s222 = int_to_ptr.vmem [resolvable:$true] %s221
          %227 = dma.hbm_to_vmem [thread:$0]  %s220, 1024, %s222, %s210, 64, 64, 4
        $region24: #{tpu_custom_call.1} parent=15 // pred_fallthru
          _
        // Predicated region
        $region25: #{tpu_custom_call.1} parent=15 // pred_check
          %p228 = pneg %p105
        $region26: #{tpu_custom_call.1} parent=15 // pred_check_branch
          %230 = sbr.rel (%p228) target = $region28
        $region27: #{tpu_custom_call.1} parent=15 // pred_region
          %s231 = smul.u32 16, %s26
          %p232 = scmp.lt.s32.totalorder %s231, 47
          %s233 = scalar_select %p232, %s231, 47
          %s234 = smul.addr %s233, 8
          %s235 = scalar_lea.vmem %s2, %s234
          %s236 = smul.u32 16, %s26
        $region28: #{tpu_custom_call.1} parent=15 // pred_fallthru
          _
        // Predicated region
        $region29: #{tpu_custom_call.1} parent=15 // pred_check
          %p237 = pneg %p131
        $region30: #{tpu_custom_call.1} parent=15 // pred_check_branch
          %239 = sbr.rel (%p237) target = $region32
        $region31: #{tpu_custom_call.1} parent=15 // pred_region
          %s240 = smul.u32 16, %s26
          %p241 = scmp.lt.s32.totalorder %s240, 47
          %s242 = scalar_select %p241, %s240, 47
          %s243 = smul.addr %s242, 8
          %s244 = scalar_lea.vmem %s3, %s243
          %s245 = smul.u32 16, %s26
        $region32: #{tpu_custom_call.1} parent=15 // pred_fallthru
          _
      $region16: #{tpu_custom_call.1} parent=5 // pred_fallthru
        _
      %p246 = scmp.le.s32.totalorder 1, %s19
      %p247 = scmp.lt.s32.totalorder %s19, 10
      %p248 = pnand %p246, %p247
      %p249 = pneg %p248
      // Predicated region
      $region33: #{tpu_custom_call.1} parent=5 // pred_check
        _
      $region34: #{tpu_custom_call.1} parent=5 // pred_check_branch
        %251 = sbr.rel (%p248) target = $region36
      $region35: #{tpu_custom_call.1} parent=5 // pred_region
        %s252 = ssub.s32 %s19, 1
        %s253 = sand.u32 %s46, 1
        %s254 = scalar_lea.sflag [#allocation4], %s253
        %s255 = sand.u32 %s46, 1
        %s256 = smul.addr %s255, 32
        %s257 = scalar_lea.vmem [#allocation3], %s256
        // Predicated region
        $region37: #{tpu_custom_call.1} parent=35 // pred_check
          %p258 = pneg %p59
        $region38: #{tpu_custom_call.1} parent=35 // pred_check_branch
          %260 = sbr.rel (%p258) target = $region40
        $region39: #{tpu_custom_call.1} parent=35 // pred_region
          %262 = dma.done %s254, 512
        $region40: #{tpu_custom_call.1} parent=35 // pred_fallthru
          _
        %s263 = sand.u32 %s72, 1
        %s264 = scalar_lea.sflag [#allocation7], %s263
        %s265 = sand.u32 %s72, 1
        %s266 = smul.addr %s265, 64
        %s267 = scalar_lea.vmem [#allocation6], %s266
        // Predicated region
        $region41: #{tpu_custom_call.1} parent=35 // pred_check
          %p268 = pneg %p85
        $region42: #{tpu_custom_call.1} parent=35 // pred_check_branch
          %270 = sbr.rel (%p268) target = $region44
        $region43: #{tpu_custom_call.1} parent=35 // pred_region
          %272 = dma.done %s264, 1024
        $region44: #{tpu_custom_call.1} parent=35 // pred_fallthru
          _
        %s273 = sand.u32 %s46, 1
        %s274 = scalar_lea.sflag [#allocation4], %s273
        %s275 = sand.u32 %s46, 1
        %s276 = smul.addr %s275, 32
        %s277 = scalar_lea.vmem [#allocation3], %s276
        %p278 = pneg %p59
        %p279 = pneg %p56
        %s280 = sand.u32 %s72, 1
        %s281 = scalar_lea.sflag [#allocation7], %s280
        %s282 = sand.u32 %s72, 1
        %s283 = smul.addr %s282, 64
        %s284 = scalar_lea.vmem [#allocation6], %s283
        %p285 = pneg %p85
        %p286 = pneg %p82
        %s287 = smul.u32 16, %s28
        %p288 = scmp.lt.s32.totalorder %s287, 47
        %s289 = scalar_select %p288, %s287, 47
        %s290 = smul.addr %s289, 8
        %s291 = scalar_lea.vmem %s2, %s290
        %p292 = pneg %p111
        %p293 = pneg %p108
        %s294 = smul.u32 16, %s28
        %p295 = scmp.lt.s32.totalorder %s294, 47
        %s296 = scalar_select %p295, %s294, 47
        %s297 = smul.addr %s296, 8
        %s298 = scalar_lea.vmem %s3, %s297
        %p299 = pneg %p137
        %p300 = pneg %p134
        %p301 = pneg %p163
        %p302 = pneg %p160
        %s303 = sand.u32 %s150, 1
        %s304 = scalar_lea.sflag [#allocation5], %s303
        %s305 = sand.u32 %s150, 1
        %s306 = smul.addr %s305, 128
        %s307 = scalar_lea.vmem [#allocation8], %s306
        %s308 = smul.u32 4, %s28
        %s309 = smul.u32 16, %s29
        %s310 = smul.u32 16, %s28
        %p311 = scmp.lt.s32.totalorder %s310, 47
        %s312 = scalar_select %p311, %s310, 47
        %s313 = smul.addr %s312, 8
        %s314 = scalar_lea.vmem %s2, %s313
        %s315 = smul.u32 16, %s28
        %s316 = smul.u32 16, %s28
        %p317 = scmp.lt.s32.totalorder %s316, 47
        %s318 = scalar_select %p317, %s316, 47
        %s319 = smul.addr %s318, 8
        %s320 = scalar_lea.vmem %s3, %s319
        %s321 = smul.u32 16, %s28
        %s322 = smul.u32 16, %s28
        %p323 = scmp.eq.s32.totalorder %s29, 0
        // Predicated region
        $region45: #{tpu_custom_call.1} parent=35 // pred_check
          %p324 = pneg %p323
        $region46: #{tpu_custom_call.1} parent=35 // pred_check_branch
          %326 = sbr.rel (%p324) target = $region48
        $region47: #{tpu_custom_call.1} parent=35 // pred_region
          %327 = vst [vmem:[#allocation2] sm:$0xff] 0.0
          %328 = vst [vmem:[#allocation2 + $0x8] sm:$0xff] 0.0
          %329 = vst [vmem:[#allocation2 + $0x10] sm:$0xff] 0.0
          %330 = vst [vmem:[#allocation2 + $0x18] sm:$0xff] 0.0
          %331 = vst [vmem:[#allocation2 + $0x20] sm:$0xff] 0.0
          %332 = vst [vmem:[#allocation2 + $0x28] sm:$0xff] 0.0
          %333 = vst [vmem:[#allocation2 + $0x30] sm:$0xff] 0.0
          %334 = vst [vmem:[#allocation2 + $0x38] sm:$0xff] 0.0
          %335 = vst [vmem:[#allocation2 + $0x40] sm:$0xff] 0.0
          %336 = vst [vmem:[#allocation2 + $0x48] sm:$0xff] 0.0
          %337 = vst [vmem:[#allocation2 + $0x50] sm:$0xff] 0.0
          %338 = vst [vmem:[#allocation2 + $0x58] sm:$0xff] 0.0
          %339 = vst [vmem:[#allocation2 + $0x60] sm:$0xff] 0.0
          %340 = vst [vmem:[#allocation2 + $0x68] sm:$0xff] 0.0
          %341 = vst [vmem:[#allocation2 + $0x70] sm:$0xff] 0.0
          %342 = vst [vmem:[#allocation2 + $0x78] sm:$0xff] 0.0
        $region48: #{tpu_custom_call.1} parent=35 // pred_fallthru
          _
        %v343 = vld [vmem:[%s257] sm:$0xff]
        %v344 = vld [vmem:[%s257 + $0x8] sm:$0xff]
        %v345 = vld [vmem:[%s257 + $0x10] sm:$0xff]
        %v346 = vld [vmem:[%s257 + $0x18] sm:$0xff]
        %v347 = vunpack.c.0.s8 %v343
        %v348 = vunpack.c.1.s8 %v343
        %v349 = vunpack.c.2.s8 %v343
        %v350 = vunpack.c.3.s8 %v343
        %v351 = vunpack.c.0.s8 %v344
        %v352 = vunpack.c.1.s8 %v344
        %v353 = vunpack.c.2.s8 %v344
        %v354 = vunpack.c.3.s8 %v344
        %v355 = vunpack.c.0.s8 %v345
        %v356 = vunpack.c.1.s8 %v345
        %v357 = vunpack.c.2.s8 %v345
        %v358 = vunpack.c.3.s8 %v345
        %v359 = vunpack.c.0.s8 %v346
        %v360 = vunpack.c.1.s8 %v346
        %v361 = vunpack.c.2.s8 %v346
        %v362 = vunpack.c.3.s8 %v346
        %v363 = vcvt.s32.f32 %v347
        %v364 = vcvt.s32.f32 %v348
        %v365 = vcvt.s32.f32 %v349
        %v366 = vcvt.s32.f32 %v350
        %v367 = vcvt.s32.f32 %v351
        %v368 = vcvt.s32.f32 %v352
        %v369 = vcvt.s32.f32 %v353
        %v370 = vcvt.s32.f32 %v354
        %v371 = vcvt.s32.f32 %v355
        %v372 = vcvt.s32.f32 %v356
        %v373 = vcvt.s32.f32 %v357
        %v374 = vcvt.s32.f32 %v358
        %v375 = vcvt.s32.f32 %v359
        %v376 = vcvt.s32.f32 %v360
        %v377 = vcvt.s32.f32 %v361
        %v378 = vcvt.s32.f32 %v362
        %v379 = vpack.c.bf16 %v364, %v363
        %v380 = vpack.c.bf16 %v366, %v365
        %v381 = vpack.c.bf16 %v368, %v367
        %v382 = vpack.c.bf16 %v370, %v369
        %v383 = vpack.c.bf16 %v372, %v371
        %v384 = vpack.c.bf16 %v374, %v373
        %v385 = vpack.c.bf16 %v376, %v375
        %v386 = vpack.c.bf16 %v378, %v377
        %v387 = vld [vmem:[#allocation2] sm:$0xff]
        %v388 = vld [vmem:[#allocation2 + $0x8] sm:$0xff]
        %v389 = vld [vmem:[#allocation2 + $0x10] sm:$0xff]
        %v390 = vld [vmem:[#allocation2 + $0x18] sm:$0xff]
        %v391 = vld [vmem:[#allocation2 + $0x20] sm:$0xff]
        %v392 = vld [vmem:[#allocation2 + $0x28] sm:$0xff]
        %v393 = vld [vmem:[#allocation2 + $0x30] sm:$0xff]
        %v394 = vld [vmem:[#allocation2 + $0x38] sm:$0xff]
        %v395 = vld [vmem:[#allocation2 + $0x40] sm:$0xff]
        %v396 = vld [vmem:[#allocation2 + $0x48] sm:$0xff]
        %v397 = vld [vmem:[#allocation2 + $0x50] sm:$0xff]
        %v398 = vld [vmem:[#allocation2 + $0x58] sm:$0xff]
        %v399 = vld [vmem:[#allocation2 + $0x60] sm:$0xff]
        %v400 = vld [vmem:[#allocation2 + $0x68] sm:$0xff]
        %v401 = vld [vmem:[#allocation2 + $0x70] sm:$0xff]
        %v402 = vld [vmem:[#allocation2 + $0x78] sm:$0xff]
        %v403 = vld [vmem:[%s267] sm:$0xf]
        %v404 = vld [vmem:[%s267 + $0x4] sm:$0xf]
        %v405 = vld [vmem:[%s267 + $0x8] sm:$0xf]
        %v406 = vld [vmem:[%s267 + $0xc] sm:$0xf]
        %v407 = vld [vmem:[%s267 + $0x10] sm:$0xf]
        %v408 = vld [vmem:[%s267 + $0x14] sm:$0xf]
        %v409 = vld [vmem:[%s267 + $0x18] sm:$0xf]
        %v410 = vld [vmem:[%s267 + $0x1c] sm:$0xf]
        %v411 = vld [vmem:[%s267 + $0x20] sm:$0xf]
        %v412 = vld [vmem:[%s267 + $0x24] sm:$0xf]
        %v413 = vld [vmem:[%s267 + $0x28] sm:$0xf]
        %v414 = vld [vmem:[%s267 + $0x2c] sm:$0xf]
        %v415 = vld [vmem:[%s267 + $0x30] sm:$0xf]
        %v416 = vld [vmem:[%s267 + $0x34] sm:$0xf]
        %v417 = vld [vmem:[%s267 + $0x38] sm:$0xf]
        %v418 = vld [vmem:[%s267 + $0x3c] sm:$0xf]
        %v435 = vunpack.c.l.b16 %v403
        %v436 = vunpack.c.l.b16 %v404
        %v437 = vunpack.c.l.b16 %v405
        %v438 = vunpack.c.l.b16 %v406
        %v439 = vunpack.c.l.b16 %v407
        %v440 = vunpack.c.l.b16 %v408
        %v441 = vunpack.c.l.b16 %v409
        %v442 = vunpack.c.l.b16 %v410
        %v443 = vunpack.c.l.b16 %v411
        %v444 = vunpack.c.l.b16 %v412
        %v445 = vunpack.c.l.b16 %v413
        %v446 = vunpack.c.l.b16 %v414
        %v447 = vunpack.c.l.b16 %v415
        %v448 = vunpack.c.l.b16 %v416
        %v449 = vunpack.c.l.b16 %v417
        %v450 = vunpack.c.l.b16 %v418
        %v451 = vpack.c.b16 %v436, %v435
        %v452 = vpack.c.b16 %v438, %v437
        %v453 = vpack.c.b16 %v440, %v439
        %v454 = vpack.c.b16 %v442, %v441
        %v455 = vpack.c.b16 %v444, %v443
        %v456 = vpack.c.b16 %v446, %v445
        %v457 = vpack.c.b16 %v448, %v447
        %v458 = vpack.c.b16 %v450, %v449
        %467 = vmatpush.bf16.msra.mxu0 %v458
        %468 = vmatpush.bf16.msra.mxu0 %v457
        %469 = vmatpush.bf16.msra.mxu0 %v456
        %470 = vmatpush.bf16.msra.mxu0 %v455
        %471 = vmatpush.bf16.msra.mxu0 %v454
        %472 = vmatpush.bf16.msra.mxu0 %v453
        %473 = vmatpush.bf16.msra.mxu0 %v452
        %474 = vmatpush.bf16.msra.mxu0 %v451
        %475 = vmatmul.bf16.gmra.mxu0 %v379
        %v476 = vpop.f32.mrf.mxu0
        %v477 = vadd.f32 0.0, %v476
        %v478 = vpop.f32.mrf.mxu0
        %v479 = vadd.f32 0.0, %v478
        %480 = vmatmul.bf16.gmra.mxu0 %v380
        %v481 = vpop.f32.mrf.mxu0
        %v482 = vadd.f32 0.0, %v481
        %v483 = vpop.f32.mrf.mxu0
        %v484 = vadd.f32 0.0, %v483
        %485 = vmatmul.bf16.gmra.mxu0 %v381
        %v486 = vpop.f32.mrf.mxu0
        %v487 = vadd.f32 0.0, %v486
        %v488 = vpop.f32.mrf.mxu0
        %v489 = vadd.f32 0.0, %v488
        %490 = vmatmul.bf16.gmra.mxu0 %v382
        %v491 = vpop.f32.mrf.mxu0
        %v492 = vadd.f32 0.0, %v491
        %v493 = vpop.f32.mrf.mxu0
        %v494 = vadd.f32 0.0, %v493
        %495 = vmatmul.bf16.gmra.mxu0 %v383
        %v496 = vpop.f32.mrf.mxu0
        %v497 = vadd.f32 0.0, %v496
        %v498 = vpop.f32.mrf.mxu0
        %v499 = vadd.f32 0.0, %v498
        %500 = vmatmul.bf16.gmra.mxu0 %v384
        %v501 = vpop.f32.mrf.mxu0
        %v502 = vadd.f32 0.0, %v501
        %v503 = vpop.f32.mrf.mxu0
        %v504 = vadd.f32 0.0, %v503
        %505 = vmatmul.bf16.gmra.mxu0 %v385
        %v506 = vpop.f32.mrf.mxu0
        %v507 = vadd.f32 0.0, %v506
        %v508 = vpop.f32.mrf.mxu0
        %v509 = vadd.f32 0.0, %v508
        %510 = vmatmul.bf16.gmra.mxu0 %v386
        %v511 = vpop.f32.mrf.mxu0
        %v512 = vadd.f32 0.0, %v511
        %v513 = vpop.f32.mrf.mxu0
        %v514 = vadd.f32 0.0, %v513
        %515 = vdwg.mxu0
        %v516 = vadd.f32 %v387, %v477
        %v517 = vadd.f32 %v388, %v479
        %v518 = vadd.f32 %v389, %v482
        %v519 = vadd.f32 %v390, %v484
        %v520 = vadd.f32 %v391, %v487
        %v521 = vadd.f32 %v392, %v489
        %v522 = vadd.f32 %v393, %v492
        %v523 = vadd.f32 %v394, %v494
        %v524 = vadd.f32 %v395, %v497
        %v525 = vadd.f32 %v396, %v499
        %v526 = vadd.f32 %v397, %v502
        %v527 = vadd.f32 %v398, %v504
        %v528 = vadd.f32 %v399, %v507
        %v529 = vadd.f32 %v400, %v509
        %v530 = vadd.f32 %v401, %v512
        %v531 = vadd.f32 %v402, %v514
        %532 = vst [vmem:[#allocation2] sm:$0xff] %v516
        %533 = vst [vmem:[#allocation2 + $0x8] sm:$0xff] %v517
        %534 = vst [vmem:[#allocation2 + $0x10] sm:$0xff] %v518
        %535 = vst [vmem:[#allocation2 + $0x18] sm:$0xff] %v519
        %536 = vst [vmem:[#allocation2 + $0x20] sm:$0xff] %v520
        %537 = vst [vmem:[#allocation2 + $0x28] sm:$0xff] %v521
        %538 = vst [vmem:[#allocation2 + $0x30] sm:$0xff] %v522
        %539 = vst [vmem:[#allocation2 + $0x38] sm:$0xff] %v523
        %540 = vst [vmem:[#allocation2 + $0x40] sm:$0xff] %v524
        %541 = vst [vmem:[#allocation2 + $0x48] sm:$0xff] %v525
        %542 = vst [vmem:[#allocation2 + $0x50] sm:$0xff] %v526
        %543 = vst [vmem:[#allocation2 + $0x58] sm:$0xff] %v527
        %544 = vst [vmem:[#allocation2 + $0x60] sm:$0xff] %v528
        %545 = vst [vmem:[#allocation2 + $0x68] sm:$0xff] %v529
        %546 = vst [vmem:[#allocation2 + $0x70] sm:$0xff] %v530
        %547 = vst [vmem:[#allocation2 + $0x78] sm:$0xff] %v531
        %p548 = scmp.eq.s32.totalorder %s29, 2
        // Predicated region
        $region49: #{tpu_custom_call.1} parent=35 // pred_check
          %p549 = pneg %p548
        $region50: #{tpu_custom_call.1} parent=35 // pred_check_branch
          %551 = sbr.rel (%p549) target = $region52
        $region51: #{tpu_custom_call.1} parent=35 // pred_region
          %v552 = vld [vmem:[#allocation2] sm:$0xff]
          %v553 = vld [vmem:[#allocation2 + $0x8] sm:$0xff]
          %v554 = vld [vmem:[#allocation2 + $0x10] sm:$0xff]
          %v555 = vld [vmem:[#allocation2 + $0x18] sm:$0xff]
          %v556 = vld [vmem:[#allocation2 + $0x20] sm:$0xff]
          %v557 = vld [vmem:[#allocation2 + $0x28] sm:$0xff]
          %v558 = vld [vmem:[#allocation2 + $0x30] sm:$0xff]
          %v559 = vld [vmem:[#allocation2 + $0x38] sm:$0xff]
          %v560 = vld [vmem:[#allocation2 + $0x40] sm:$0xff]
          %v561 = vld [vmem:[#allocation2 + $0x48] sm:$0xff]
          %v562 = vld [vmem:[#allocation2 + $0x50] sm:$0xff]
          %v563 = vld [vmem:[#allocation2 + $0x58] sm:$0xff]
          %v564 = vld [vmem:[#allocation2 + $0x60] sm:$0xff]
          %v565 = vld [vmem:[#allocation2 + $0x68] sm:$0xff]
          %v566 = vld [vmem:[#allocation2 + $0x70] sm:$0xff]
          %v567 = vld [vmem:[#allocation2 + $0x78] sm:$0xff]
          %v568 = vld [vmem:[%s320] sm:$0xff]
          %v569 = vld [vmem:[%s320 + $0x8] sm:$0xff]
          %v570 = vld [vmem:[%s320 + $0x10] sm:$0xff]
          %v571 = vld [vmem:[%s320 + $0x18] sm:$0xff]
          %v572 = vld [vmem:[%s320 + $0x20] sm:$0xff]
          %v573 = vld [vmem:[%s320 + $0x28] sm:$0xff]
          %v574 = vld [vmem:[%s320 + $0x30] sm:$0xff]
          %v575 = vld [vmem:[%s320 + $0x38] sm:$0xff]
          %v576 = vld [vmem:[%s320 + $0x40] sm:$0xff]
          %v577 = vld [vmem:[%s320 + $0x48] sm:$0xff]
          %v578 = vld [vmem:[%s320 + $0x50] sm:$0xff]
          %v579 = vld [vmem:[%s320 + $0x58] sm:$0xff]
          %v580 = vld [vmem:[%s320 + $0x60] sm:$0xff]
          %v581 = vld [vmem:[%s320 + $0x68] sm:$0xff]
          %v582 = vld [vmem:[%s320 + $0x70] sm:$0xff]
          %v583 = vld [vmem:[%s320 + $0x78] sm:$0xff]
          %585 = vset.pattern.permute.xlu0 0
          %586 = vperm.xlu0 %585, %v568
          %v587 = vpop.permute.xlu0 %586
          %590 = vset.pattern.permute.xlu0 0
          %591 = vperm.xlu0 %590, %v569
          %v592 = vpop.permute.xlu0 %591
          %595 = vset.pattern.permute.xlu0 0
          %596 = vperm.xlu0 %595, %v570
          %v597 = vpop.permute.xlu0 %596
          %600 = vset.pattern.permute.xlu0 0
          %601 = vperm.xlu0 %600, %v571
          %v602 = vpop.permute.xlu0 %601
          %605 = vset.pattern.permute.xlu0 0
          %606 = vperm.xlu0 %605, %v572
          %v607 = vpop.permute.xlu0 %606
          %610 = vset.pattern.permute.xlu0 0
          %611 = vperm.xlu0 %610, %v573
          %v612 = vpop.permute.xlu0 %611
          %615 = vset.pattern.permute.xlu0 0
          %616 = vperm.xlu0 %615, %v574
          %v617 = vpop.permute.xlu0 %616
          %620 = vset.pattern.permute.xlu0 0
          %621 = vperm.xlu0 %620, %v575
          %v622 = vpop.permute.xlu0 %621
          %625 = vset.pattern.permute.xlu0 0
          %626 = vperm.xlu0 %625, %v576
          %v627 = vpop.permute.xlu0 %626
          %630 = vset.pattern.permute.xlu0 0
          %631 = vperm.xlu0 %630, %v577
          %v632 = vpop.permute.xlu0 %631
          %635 = vset.pattern.permute.xlu0 0
          %636 = vperm.xlu0 %635, %v578
          %v637 = vpop.permute.xlu0 %636
          %640 = vset.pattern.permute.xlu0 0
          %641 = vperm.xlu0 %640, %v579
          %v642 = vpop.permute.xlu0 %641
          %645 = vset.pattern.permute.xlu0 0
          %646 = vperm.xlu0 %645, %v580
          %v647 = vpop.permute.xlu0 %646
          %650 = vset.pattern.permute.xlu0 0
          %651 = vperm.xlu0 %650, %v581
          %v652 = vpop.permute.xlu0 %651
          %655 = vset.pattern.permute.xlu0 0
          %656 = vperm.xlu0 %655, %v582
          %v657 = vpop.permute.xlu0 %656
          %660 = vset.pattern.permute.xlu0 0
          %661 = vperm.xlu0 %660, %v583
          %v662 = vpop.permute.xlu0 %661
          %v664 = vmul.f32 %v552, %v587
          %v665 = vmul.f32 %v553, %v592
          %v666 = vmul.f32 %v554, %v597
          %v667 = vmul.f32 %v555, %v602
          %v668 = vmul.f32 %v556, %v607
          %v669 = vmul.f32 %v557, %v612
          %v670 = vmul.f32 %v558, %v617
          %v671 = vmul.f32 %v559, %v622
          %v672 = vmul.f32 %v560, %v627
          %v673 = vmul.f32 %v561, %v632
          %v674 = vmul.f32 %v562, %v637
          %v675 = vmul.f32 %v563, %v642
          %v676 = vmul.f32 %v564, %v647
          %v677 = vmul.f32 %v565, %v652
          %v678 = vmul.f32 %v566, %v657
          %v679 = vmul.f32 %v567, %v662
          %v680 = vld [vmem:[%s314] sm:$0xff]
          %v681 = vld [vmem:[%s314 + $0x8] sm:$0xff]
          %v682 = vld [vmem:[%s314 + $0x10] sm:$0xff]
          %v683 = vld [vmem:[%s314 + $0x18] sm:$0xff]
          %v684 = vld [vmem:[%s314 + $0x20] sm:$0xff]
          %v685 = vld [vmem:[%s314 + $0x28] sm:$0xff]
          %v686 = vld [vmem:[%s314 + $0x30] sm:$0xff]
          %v687 = vld [vmem:[%s314 + $0x38] sm:$0xff]
          %v688 = vld [vmem:[%s314 + $0x40] sm:$0xff]
          %v689 = vld [vmem:[%s314 + $0x48] sm:$0xff]
          %v690 = vld [vmem:[%s314 + $0x50] sm:$0xff]
          %v691 = vld [vmem:[%s314 + $0x58] sm:$0xff]
          %v692 = vld [vmem:[%s314 + $0x60] sm:$0xff]
          %v693 = vld [vmem:[%s314 + $0x68] sm:$0xff]
          %v694 = vld [vmem:[%s314 + $0x70] sm:$0xff]
          %v695 = vld [vmem:[%s314 + $0x78] sm:$0xff]
          %v696 = vadd.f32 %v664, %v680
          %v697 = vadd.f32 %v665, %v681
          %v698 = vadd.f32 %v666, %v682
          %v699 = vadd.f32 %v667, %v683
          %v700 = vadd.f32 %v668, %v684
          %v701 = vadd.f32 %v669, %v685
          %v702 = vadd.f32 %v670, %v686
          %v703 = vadd.f32 %v671, %v687
          %v704 = vadd.f32 %v672, %v688
          %v705 = vadd.f32 %v673, %v689
          %v706 = vadd.f32 %v674, %v690
          %v707 = vadd.f32 %v675, %v691
          %v708 = vadd.f32 %v676, %v692
          %v709 = vadd.f32 %v677, %v693
          %v710 = vadd.f32 %v678, %v694
          %v711 = vadd.f32 %v679, %v695
          %vm712 = vcmp.gt.f32.partialorder %v696, 0.0
          %vm713 = vcmp.gt.f32.partialorder %v697, 0.0
          %vm714 = vcmp.gt.f32.partialorder %v698, 0.0
          %vm715 = vcmp.gt.f32.partialorder %v699, 0.0
          %vm716 = vcmp.gt.f32.partialorder %v700, 0.0
          %vm717 = vcmp.gt.f32.partialorder %v701, 0.0
          %vm718 = vcmp.gt.f32.partialorder %v702, 0.0
          %vm719 = vcmp.gt.f32.partialorder %v703, 0.0
          %vm720 = vcmp.gt.f32.partialorder %v704, 0.0
          %vm721 = vcmp.gt.f32.partialorder %v705, 0.0
          %vm722 = vcmp.gt.f32.partialorder %v706, 0.0
          %vm723 = vcmp.gt.f32.partialorder %v707, 0.0
          %vm724 = vcmp.gt.f32.partialorder %v708, 0.0
          %vm725 = vcmp.gt.f32.partialorder %v709, 0.0
          %vm726 = vcmp.gt.f32.partialorder %v710, 0.0
          %vm727 = vcmp.gt.f32.partialorder %v711, 0.0
          %v728 = vmul.f32 %v696, 0.01
          %v729 = vmul.f32 %v697, 0.01
          %v730 = vmul.f32 %v698, 0.01
          %v731 = vmul.f32 %v699, 0.01
          %v732 = vmul.f32 %v700, 0.01
          %v733 = vmul.f32 %v701, 0.01
          %v734 = vmul.f32 %v702, 0.01
          %v735 = vmul.f32 %v703, 0.01
          %v736 = vmul.f32 %v704, 0.01
          %v737 = vmul.f32 %v705, 0.01
          %v738 = vmul.f32 %v706, 0.01
          %v739 = vmul.f32 %v707, 0.01
          %v740 = vmul.f32 %v708, 0.01
          %v741 = vmul.f32 %v709, 0.01
          %v742 = vmul.f32 %v710, 0.01
          %v743 = vmul.f32 %v711, 0.01
          %v744 = vsel %vm712, %v696, %v728
          %v745 = vsel %vm713, %v697, %v729
          %v746 = vsel %vm714, %v698, %v730
          %v747 = vsel %vm715, %v699, %v731
          %v748 = vsel %vm716, %v700, %v732
          %v749 = vsel %vm717, %v701, %v733
          %v750 = vsel %vm718, %v702, %v734
          %v751 = vsel %vm719, %v703, %v735
          %v752 = vsel %vm720, %v704, %v736
          %v753 = vsel %vm721, %v705, %v737
          %v754 = vsel %vm722, %v706, %v738
          %v755 = vsel %vm723, %v707, %v739
          %v756 = vsel %vm724, %v708, %v740
          %v757 = vsel %vm725, %v709, %v741
          %v758 = vsel %vm726, %v710, %v742
          %v759 = vsel %vm727, %v711, %v743
          %760 = vst [vmem:[%s307] sm:$0xff] %v744
          %761 = vst [vmem:[%s307 + $0x8] sm:$0xff] %v745
          %762 = vst [vmem:[%s307 + $0x10] sm:$0xff] %v746
          %763 = vst [vmem:[%s307 + $0x18] sm:$0xff] %v747
          %764 = vst [vmem:[%s307 + $0x20] sm:$0xff] %v748
          %765 = vst [vmem:[%s307 + $0x28] sm:$0xff] %v749
          %766 = vst [vmem:[%s307 + $0x30] sm:$0xff] %v750
          %767 = vst [vmem:[%s307 + $0x38] sm:$0xff] %v751
          %768 = vst [vmem:[%s307 + $0x40] sm:$0xff] %v752
          %769 = vst [vmem:[%s307 + $0x48] sm:$0xff] %v753
          %770 = vst [vmem:[%s307 + $0x50] sm:$0xff] %v754
          %771 = vst [vmem:[%s307 + $0x58] sm:$0xff] %v755
          %772 = vst [vmem:[%s307 + $0x60] sm:$0xff] %v756
          %773 = vst [vmem:[%s307 + $0x68] sm:$0xff] %v757
          %774 = vst [vmem:[%s307 + $0x70] sm:$0xff] %v758
          %775 = vst [vmem:[%s307 + $0x78] sm:$0xff] %v759
        $region52: #{tpu_custom_call.1} parent=35 // pred_fallthru
          _
        %s776 = sand.u32 %s150, 1
        %s777 = scalar_lea.sflag [#allocation5], %s776
        %s778 = sand.u32 %s150, 1
        %s779 = smul.addr %s778, 128
        %s780 = scalar_lea.vmem [#allocation8], %s779
        // Predicated region
        $region53: #{tpu_custom_call.1} parent=35 // pred_check
          %p781 = pneg %p160
        $region54: #{tpu_custom_call.1} parent=35 // pred_check_branch
          %783 = sbr.rel (%p781) target = $region56
        $region55: #{tpu_custom_call.1} parent=35 // pred_region
          %s784 = smul.u32 16, %s28
          %786 = vsyncadd %s777, 0
          %s787 = smul.addr %s784, 8
          %s788 = scalar_lea.hbm %s4, %s787
          %s789 = sshll.u32 %s780, 4
          %s790 = int_to_ptr.vmem [resolvable:$true] %s789
          %s791 = sshll.u32 %s788, 4
          %s792 = int_to_ptr.hbm [resolvable:$true] %s791
          %797 = dma.vmem_to_hbm [thread:$0]  %s790, 2048, %s792, %s777, 128, 128, 8
        $region56: #{tpu_custom_call.1} parent=35 // pred_fallthru
          _
      $region36: #{tpu_custom_call.1} parent=5 // pred_fallthru
        _
      %p798 = scmp.le.s32.totalorder 2, %s19
      // Predicated region
      $region57: #{tpu_custom_call.1} parent=5 // pred_check
        %p799 = pneg %p798
      $region58: #{tpu_custom_call.1} parent=5 // pred_check_branch
        %801 = sbr.rel (%p799) target = $region60
      $region59: #{tpu_custom_call.1} parent=5 // pred_region
        %s802 = ssub.s32 %s19, 2
        // Predicated region
        $region61: #{tpu_custom_call.1} parent=59 // pred_check
          %p803 = pneg %p166
        $region62: #{tpu_custom_call.1} parent=59 // pred_check_branch
          %805 = sbr.rel (%p803) target = $region64
        $region63: #{tpu_custom_call.1} parent=59 // pred_region
          %s806 = sand.u32 %s151, 1
          %s807 = scalar_lea.sflag [#allocation5], %s806
          %s808 = sand.u32 %s151, 1
          %s809 = smul.addr %s808, 128
          %s810 = scalar_lea.vmem [#allocation8], %s809
          %812 = dma.done %s807, 2048
        $region64: #{tpu_custom_call.1} parent=59 // pred_fallthru
          _
      $region60: #{tpu_custom_call.1} parent=5 // pred_fallthru
        _
    $region6: #{tpu_custom_call.1} parent=1 // loop_footer
      %s23 = sadd.s32 1, %s19
    $region7: #{tpu_custom_call.1} parent=1 // loop_footer_branch
      %18 = sbr.rel target = $region3
    $region8: #{tpu_custom_call.1} parent=1 // loop_exit
      _
    %813 = vsyncpa [#allocation4], 1
    %s814 = scalar_lea.sflag [#allocation4], 1
    %815 = vsyncpa %s814, 1
    %816 = vsyncpa [#allocation7], 1
    %s817 = scalar_lea.sflag [#allocation7], 1
    %818 = vsyncpa %s817, 1
    %819 = vsyncpa [#allocation5], 1
    %s820 = scalar_lea.sflag [#allocation5], 1
    %821 = vsyncpa %s820, 1

</llo_original>
